<compile_context>
chip_gen: v7x
topology: tpu7x:2x2x1
jax: 0.10.0
libtpu: 0.0.40
codegen_flags: <defaults>
</compile_context>

<pallas_src>
import jax
import jax.numpy as jnp
from jax.experimental import pallas as pl
from jax.experimental.pallas import tpu as pltpu


def mlp_kernel(x_ref, w1_ref, b1_ref, w2_ref, b2_ref, w3_ref, b3_ref, o_ref):
    """Fused 3-layer MLP on one lane-dense batch tile.

    x_ref:  (5, TM)  bf16   (batch on lanes)
    wN_ref: (out, in) bf16  (PyTorch layout, VMEM-resident)
    bN_ref: (out, 1) f32    (broadcast across lanes onto the f32 accumulator)
    o_ref:  (2, TM)  f32
    """
    x = x_ref[...]                                                      # (5, TM) bf16
    h1 = jnp.dot(w1_ref[...], x, preferred_element_type=jnp.float32)    # (10, TM) f32
    h1 = jnp.maximum(h1 + b1_ref[...], 0.0).astype(jnp.bfloat16)        # ReLU on f32 acc
    h2 = jnp.dot(w2_ref[...], h1, preferred_element_type=jnp.float32)   # (5, TM) f32
    h2 = jnp.maximum(h2 + b2_ref[...], 0.0).astype(jnp.bfloat16)
    y = jnp.dot(w3_ref[...], h2, preferred_element_type=jnp.float32)    # (2, TM) f32
    o_ref[...] = (y + b3_ref[...]).astype(o_ref.dtype)


def mlp_forward(x, w1, b1, w2, b2, w3, b3, *, block_rows=1024):
    """Forward pass of NonLinearModel.

    x: (N, 5) float32. Weights/biases in PyTorch layout: w (out, in), b (out,).
    Returns (N, 2) float32.
    """
    n, f_in = x.shape
    f_out = w3.shape[0]

    # Batch tile: lane-dense (multiple of 128), capped for small inputs.
    block_rows = max(128, min(block_rows, ((n + 127) // 128) * 128))
    n_pad = ((n + block_rows - 1) // block_rows) * block_rows
    grid = (n_pad // block_rows,)

    # Transposed, lane-dense, bf16 input stream: (5, n_pad).
    xt = jnp.pad(x, ((0, n_pad - n), (0, 0))).T.astype(jnp.bfloat16)
    w1b, w2b, w3b = (w.astype(jnp.bfloat16) for w in (w1, w2, w3))
    b1c, b2c, b3c = (b.reshape(-1, 1).astype(jnp.float32) for b in (b1, b2, b3))

    def resident(shape):  # weights/biases: same block every grid step -> stay in VMEM
        return pl.BlockSpec(shape, lambda i: (0, 0))

    flops = 2 * n_pad * (w1.shape[0] * w1.shape[1]
                         + w2.shape[0] * w2.shape[1]
                         + w3.shape[0] * w3.shape[1])
    bytes_accessed = (xt.size * 2 + n_pad * f_out * 4
                      + sum(w.size * 2 for w in (w1b, w2b, w3b))
                      + sum(b.size * 4 for b in (b1c, b2c, b3c)))

    out_t = pl.pallas_call(
        mlp_kernel,
        out_shape=jax.ShapeDtypeStruct((f_out, n_pad), jnp.float32),
        grid=grid,
        in_specs=[
            pl.BlockSpec((f_in, block_rows), lambda i: (0, i)),   # x tiles stream in
            resident(w1b.shape), resident(b1c.shape),
            resident(w2b.shape), resident(b2c.shape),
            resident(w3b.shape), resident(b3c.shape),
        ],
        out_specs=pl.BlockSpec((f_out, block_rows), lambda i: (0, i)),
        compiler_params=pltpu.CompilerParams(
            dimension_semantics=("parallel",),        # shard batch tiles across TCs (v7x)
            vmem_limit_bytes=32 * 1024 * 1024,        # safe on v7x's 64 MiB VMEM
        ),
        cost_estimate=pl.CostEstimate(
            flops=flops, transcendentals=0, bytes_accessed=bytes_accessed),
    )(xt, w1b, b1c, w2b, b2c, w3b, b3c)

    return out_t[:, :n].T                              # (N, 2) f32


def init_params(key):
    """Deterministic init in PyTorch nn.Linear layout: weight (out, in), bias (out,)."""
    ks = jax.random.split(key, 6)
    w1 = jax.random.normal(ks[0], (10, 5), jnp.float32) * 0.3
    b1 = jax.random.normal(ks[1], (10,), jnp.float32) * 0.1
    w2 = jax.random.normal(ks[2], (5, 10), jnp.float32) * 0.3
    b2 = jax.random.normal(ks[3], (5,), jnp.float32) * 0.1
    w3 = jax.random.normal(ks[4], (2, 5), jnp.float32) * 0.3
    b3 = jax.random.normal(ks[5], (2,), jnp.float32) * 0.1
    return w1, b1, w2, b2, w3, b3


def reference_forward(x, w1, b1, w2, b2, w3, b3, *, match_bf16=True):
    """Pure-JAX reference (PyTorch semantics). With match_bf16=True it mimics the
    kernel's bf16 operand rounding (f32 accumulation) for tight comparison."""
    cast = (lambda a: a.astype(jnp.bfloat16).astype(jnp.float32)) if match_bf16 else (lambda a: a)
    h1 = cast(jnp.maximum(cast(x) @ cast(w1).T + b1, 0.0))
    h2 = cast(jnp.maximum(h1 @ cast(w2).T + b2, 0.0))
    return h2 @ cast(w3).T + b3


if __name__ == "__main__":
    key = jax.random.PRNGKey(0)
    kx, kp = jax.random.split(key)

    batch = 8
    x = jax.random.normal(kx, (batch, 5), jnp.float32)
    params = init_params(kp)

    out = jax.block_until_ready(mlp_forward(x, *params))
    ref = reference_forward(x, *params)

    assert out.shape == (batch, 2), out.shape
    assert jnp.allclose(out, ref, atol=1e-3, rtol=1e-3), "mismatch vs JAX reference"

    print("KERNEL_OK")
</pallas_src>

<mosaic_0001>
module attributes {stable_mosaic.version = 11 : i64} {
  func.func @mlp_kernel(%arg0: i32, %arg1: memref<5x128xbf16, #tpu.memory_space<vmem>>, %arg2: memref<10x5xbf16, #tpu.memory_space<vmem>>, %arg3: memref<10x1xf32, #tpu.memory_space<vmem>>, %arg4: memref<5x10xbf16, #tpu.memory_space<vmem>>, %arg5: memref<5x1xf32, #tpu.memory_space<vmem>>, %arg6: memref<2x5xbf16, #tpu.memory_space<vmem>>, %arg7: memref<2x1xf32, #tpu.memory_space<vmem>>, %arg8: memref<2x128xf32, #tpu.memory_space<vmem>>) attributes {dimension_semantics = [#tpu.dimension_semantics<parallel>], iteration_bounds = array<i64: 1>, scalar_prefetch = 0 : i64, scratch_operands = 0 : i64, tpu.core_type = #tpu.core_type<tc>, window_params = [{transform_indices = @transform_0, window_bounds = array<i64: 5, 128>}, {pipeline_mode = #tpu.pipeline_mode<synchronous>, transform_indices = @transform_1, window_bounds = array<i64: 10, 5>}, {pipeline_mode = #tpu.pipeline_mode<synchronous>, transform_indices = @transform_2, window_bounds = array<i64: 10, 1>}, {pipeline_mode = #tpu.pipeline_mode<synchronous>, transform_indices = @transform_3, window_bounds = array<i64: 5, 10>}, {pipeline_mode = #tpu.pipeline_mode<synchronous>, transform_indices = @transform_4, window_bounds = array<i64: 5, 1>}, {pipeline_mode = #tpu.pipeline_mode<synchronous>, transform_indices = @transform_5, window_bounds = array<i64: 2, 5>}, {pipeline_mode = #tpu.pipeline_mode<synchronous>, transform_indices = @transform_6, window_bounds = array<i64: 2, 1>}, {transform_indices = @transform_7, window_bounds = array<i64: 2, 128>}]} {
    %c0 = arith.constant 0 : index
    %c0_0 = arith.constant 0 : index
    %0 = vector.load %arg1[%c0, %c0_0] : memref<5x128xbf16, #tpu.memory_space<vmem>>, vector<5x128xbf16>
    %c0_1 = arith.constant 0 : index
    %c0_2 = arith.constant 0 : index
    %1 = vector.load %arg2[%c0_1, %c0_2] : memref<10x5xbf16, #tpu.memory_space<vmem>>, vector<10x5xbf16>
    %cst = arith.constant dense<0.000000e+00> : vector<10x128xf32>
    %2 = tpu.matmul %1, %0, %cst {dimension_numbers = #tpu.dot_dimension_numbers<[1], [0], [0], [1], [0, 0, 1, 1], [], []>} : vector<10x5xbf16>, vector<5x128xbf16>, vector<10x128xf32> -> vector<10x128xf32>
    %c0_3 = arith.constant 0 : index
    %c0_4 = arith.constant 0 : index
    %3 = vector.load %arg3[%c0_3, %c0_4] : memref<10x1xf32, #tpu.memory_space<vmem>>, vector<10x1xf32>
    %4 = vector.broadcast %3 : vector<10x1xf32> to vector<10x128xf32>
    %5 = arith.addf %2, %4 : vector<10x128xf32>
    %cst_5 = arith.constant 0.000000e+00 : f32
    %6 = vector.broadcast %cst_5 : f32 to vector<10x128xf32>
    %7 = arith.maximumf %5, %6 : vector<10x128xf32>
    %8 = arith.truncf %7 : vector<10x128xf32> to vector<10x128xbf16>
    %c0_6 = arith.constant 0 : index
    %c0_7 = arith.constant 0 : index
    %9 = vector.load %arg4[%c0_6, %c0_7] : memref<5x10xbf16, #tpu.memory_space<vmem>>, vector<5x10xbf16>
    %cst_8 = arith.constant dense<0.000000e+00> : vector<5x128xf32>
    %10 = tpu.matmul %9, %8, %cst_8 {dimension_numbers = #tpu.dot_dimension_numbers<[1], [0], [0], [1], [0, 0, 1, 1], [], []>} : vector<5x10xbf16>, vector<10x128xbf16>, vector<5x128xf32> -> vector<5x128xf32>
    %c0_9 = arith.constant 0 : index
    %c0_10 = arith.constant 0 : index
    %11 = vector.load %arg5[%c0_9, %c0_10] : memref<5x1xf32, #tpu.memory_space<vmem>>, vector<5x1xf32>
    %12 = vector.broadcast %11 : vector<5x1xf32> to vector<5x128xf32>
    %13 = arith.addf %10, %12 : vector<5x128xf32>
    %cst_11 = arith.constant 0.000000e+00 : f32
    %14 = vector.broadcast %cst_11 : f32 to vector<5x128xf32>
    %15 = arith.maximumf %13, %14 : vector<5x128xf32>
    %16 = arith.truncf %15 : vector<5x128xf32> to vector<5x128xbf16>
    %c0_12 = arith.constant 0 : index
    %c0_13 = arith.constant 0 : index
    %17 = vector.load %arg6[%c0_12, %c0_13] : memref<2x5xbf16, #tpu.memory_space<vmem>>, vector<2x5xbf16>
    %cst_14 = arith.constant dense<0.000000e+00> : vector<2x128xf32>
    %18 = tpu.matmul %17, %16, %cst_14 {dimension_numbers = #tpu.dot_dimension_numbers<[1], [0], [0], [1], [0, 0, 1, 1], [], []>} : vector<2x5xbf16>, vector<5x128xbf16>, vector<2x128xf32> -> vector<2x128xf32>
    %c0_15 = arith.constant 0 : index
    %c0_16 = arith.constant 0 : index
    %19 = vector.load %arg7[%c0_15, %c0_16] : memref<2x1xf32, #tpu.memory_space<vmem>>, vector<2x1xf32>
    %20 = vector.broadcast %19 : vector<2x1xf32> to vector<2x128xf32>
    %21 = arith.addf %18, %20 : vector<2x128xf32>
    %c0_17 = arith.constant 0 : index
    %c0_18 = arith.constant 0 : index
    %22 = vector.load %arg8[%c0_17, %c0_18] : memref<2x128xf32, #tpu.memory_space<vmem>>, vector<2x128xf32>
    tpu.vector_store %arg8[%c0_17, %c0_18], %21 {strides = array<i32>} : memref<2x128xf32, #tpu.memory_space<vmem>>, vector<2x128xf32>,
    return
  }
  func.func @transform_0(%arg0: i32) -> (i32, i32) {
    %c0_i32 = arith.constant 0 : i32
    %c0_i32_0 = arith.constant 0 : i32
    return %c0_i32, %arg0 : i32, i32
  }
  func.func @transform_1(%arg0: i32) -> (i32, i32) {
    %c0_i32 = arith.constant 0 : i32
    %c0_i32_0 = arith.constant 0 : i32
    %c0_i32_1 = arith.constant 0 : i32
    return %c0_i32, %c0_i32_0 : i32, i32
  }
  func.func @transform_2(%arg0: i32) -> (i32, i32) {
    %c0_i32 = arith.constant 0 : i32
    %c0_i32_0 = arith.constant 0 : i32
    %c0_i32_1 = arith.constant 0 : i32
    return %c0_i32, %c0_i32_0 : i32, i32
  }
  func.func @transform_3(%arg0: i32) -> (i32, i32) {
    %c0_i32 = arith.constant 0 : i32
    %c0_i32_0 = arith.constant 0 : i32
    %c0_i32_1 = arith.constant 0 : i32
    return %c0_i32, %c0_i32_0 : i32, i32
  }
  func.func @transform_4(%arg0: i32) -> (i32, i32) {
    %c0_i32 = arith.constant 0 : i32
    %c0_i32_0 = arith.constant 0 : i32
    %c0_i32_1 = arith.constant 0 : i32
    return %c0_i32, %c0_i32_0 : i32, i32
  }
  func.func @transform_5(%arg0: i32) -> (i32, i32) {
    %c0_i32 = arith.constant 0 : i32
    %c0_i32_0 = arith.constant 0 : i32
    %c0_i32_1 = arith.constant 0 : i32
    return %c0_i32, %c0_i32_0 : i32, i32
  }
  func.func @transform_6(%arg0: i32) -> (i32, i32) {
    %c0_i32 = arith.constant 0 : i32
    %c0_i32_0 = arith.constant 0 : i32
    %c0_i32_1 = arith.constant 0 : i32
    return %c0_i32, %c0_i32_0 : i32, i32
  }
  func.func @transform_7(%arg0: i32) -> (i32, i32) {
    %c0_i32 = arith.constant 0 : i32
    %c0_i32_0 = arith.constant 0 : i32
    return %c0_i32, %arg0 : i32, i32
  }
}

</mosaic_0001>

<llo_original>
// kernel: tpu_custom_call.1
$region0: #{tpu_custom_call.1}
  #allocation0 [shape = 'u32[]', space=smem, size = 0x4, offset = 0x4, fixed_abs, tag = 'smem constant byte address 0x4 - core index']
  #allocation1 [shape = 'u32[144,128]{1,0:T(1,128)}', space=vmem, size = 0x12000, scoped, tag = 'internal scratch']
  %s0 = inlined_call_operand.vmem [shape: bf16[5,128], index: 0, kind: input, shape index: {}]
  %s1 = inlined_call_operand.vmem [shape: bf16[10,5], index: 1, kind: input, shape index: {}]
  %s2 = inlined_call_operand.vmem [shape: f32[10,1], index: 2, kind: input, shape index: {}]
  %s3 = inlined_call_operand.vmem [shape: bf16[5,10], index: 3, kind: input, shape index: {}]
  %s4 = inlined_call_operand.vmem [shape: f32[5,1], index: 4, kind: input, shape index: {}]
  %s5 = inlined_call_operand.vmem [shape: bf16[2,5], index: 5, kind: input, shape index: {}]
  %s6 = inlined_call_operand.vmem [shape: f32[2,1], index: 6, kind: input, shape index: {}]
  %s7 = inlined_call_operand.hbm [shape: f32[2,128], index: 7, kind: output, shape index: {}]
  %s8 = sld [smem:[#allocation0]]
  $region38: #{tpu_custom_call.1} parent=0
    _
  %s10 = ssub.s32 1, %s8
  %s11 = scalar_select 0, %s10, %s8
  $region1: #{tpu_custom_call.1} parent=0
    #allocation2 [shape = 'u8[1024]{0}', space=vmem, size = 0x400, scoped, tag = 'output window, operand 0, single buffered']
    #allocation3 [shape = 's32[1]{0}', space=sflag, size = 0x4, scoped, tag = 'scoped memory for tpu_custom_call.1']
    %12 = vsyncpa [#allocation3], 0
    // Predicated region
    $region2: #{tpu_custom_call.1} parent=1 // pred_check
      _
    $region3: #{tpu_custom_call.1} parent=1 // pred_check_branch
      %14 = sbr.rel (0) target = $region5
    $region4: #{tpu_custom_call.1} parent=1 // pred_region
      _
    $region5: #{tpu_custom_call.1} parent=1 // pred_fallthru
      _
    // Predicated region
    $region6: #{tpu_custom_call.1} parent=1 // pred_check
      _
    $region7: #{tpu_custom_call.1} parent=1 // pred_check_branch
      %16 = sbr.rel (0) target = $region9
    $region8: #{tpu_custom_call.1} parent=1 // pred_region
      _
    $region9: #{tpu_custom_call.1} parent=1 // pred_fallthru
      _
    // Predicated region
    $region10: #{tpu_custom_call.1} parent=1 // pred_check
      _
    $region11: #{tpu_custom_call.1} parent=1 // pred_check_branch
      %18 = sbr.rel (0) target = $region13
    $region12: #{tpu_custom_call.1} parent=1 // pred_region
      _
    $region13: #{tpu_custom_call.1} parent=1 // pred_fallthru
      _
    // Predicated region
    $region14: #{tpu_custom_call.1} parent=1 // pred_check
      _
    $region15: #{tpu_custom_call.1} parent=1 // pred_check_branch
      %20 = sbr.rel (0) target = $region17
    $region16: #{tpu_custom_call.1} parent=1 // pred_region
      _
    $region17: #{tpu_custom_call.1} parent=1 // pred_fallthru
      _
    // Predicated region
    $region18: #{tpu_custom_call.1} parent=1 // pred_check
      _
    $region19: #{tpu_custom_call.1} parent=1 // pred_check_branch
      %22 = sbr.rel (0) target = $region21
    $region20: #{tpu_custom_call.1} parent=1 // pred_region
      _
    $region21: #{tpu_custom_call.1} parent=1 // pred_fallthru
      _
    // Predicated region
    $region22: #{tpu_custom_call.1} parent=1 // pred_check
      _
    $region23: #{tpu_custom_call.1} parent=1 // pred_check_branch
      %24 = sbr.rel (0) target = $region25
    $region24: #{tpu_custom_call.1} parent=1 // pred_region
      _
    $region25: #{tpu_custom_call.1} parent=1 // pred_fallthru
      _
    // Predicated region
    $region26: #{tpu_custom_call.1} parent=1 // pred_check
      _
    $region27: #{tpu_custom_call.1} parent=1 // pred_check_branch
      %26 = sbr.rel (0) target = $region29
    $region28: #{tpu_custom_call.1} parent=1 // pred_region
      _
    $region29: #{tpu_custom_call.1} parent=1 // pred_fallthru
      _
    %v28 = vld [vmem:[%s0] sm:$0x7]
    %v29 = vld [vmem:[%s1] sm:$0xf]
    %v30 = vld [vmem:[%s1 + $0x4] sm:$0x1]
    %v31 = vld [vmem:[%s2] sm:$0xff]
    %v32 = vld [vmem:[%s2 + $0x8] sm:$0x3]
    %34 = vset.pattern.permute.xlu0 0
    %35 = vperm.xlu0 %34, %v31
    %v36 = vpop.permute.xlu0 %35
    %39 = vset.pattern.permute.xlu0 0
    %40 = vperm.xlu0 %39, %v32
    %v41 = vpop.permute.xlu0 %40
    %v45 = vunpack.c.l.b16 %v29
    %v46 = vunpack.c.l.b16 %v30
    %v47 = vpack.c.b16 %v46, %v45
    %vm48 = vcmask 39936
    %v50 = vsel %vm48, %v47, 0
    %vm52 = vcmask 1041408
    %vm53 = vcmask 1042432
    %v54 = vsel %vm52, 4294967295, 65535
    %v55 = vsel %vm53, %v54, 0
    %v57 = vand.u32 %v28, %v55
    %59 = vmatprep.subr.bf16.mxu0 0
    %60 = vmatpush1.bf16.msra.mxu0 %v57
    %61 = vmatprep.subr.bf16.mxu0 0
    %62 = vmatpush1.bf16.msra.mxu0 0
    %63 = vmatprep.subr.bf16.mxu0 0
    %64 = vmatpush1.bf16.msra.mxu0 0
    %65 = vmatprep.subr.bf16.mxu0 0
    %66 = vmatpush1.bf16.msra.mxu0 0
    %67 = vmatprep.subr.bf16.mxu0 0
    %68 = vmatpush1.bf16.msra.mxu0 0
    %69 = vmatprep.subr.bf16.mxu0 0
    %70 = vmatpush1.bf16.msra.mxu0 0
    %71 = vmatprep.subr.bf16.mxu0 0
    %72 = vmatpush1.bf16.msra.mxu0 0
    %73 = vmatprep.subr.bf16.mxu0 0
    %74 = vmatpush1.bf16.msra.mxu0 0
    %75 = vmatprep.subr.bf16.mxu0 0
    %76 = vmatpush1.bf16.msra.mxu0 0
    %77 = vmatprep.subr.bf16.mxu0 0
    %78 = vmatpush1.bf16.msra.mxu0 0
    %79 = vmatprep.subr.bf16.mxu0 0
    %80 = vmatpush1.bf16.msra.mxu0 0
    %81 = vmatprep.subr.bf16.mxu0 0
    %82 = vmatpush1.bf16.msra.mxu0 0
    %83 = vmatprep.subr.bf16.mxu0 0
    %84 = vmatpush1.bf16.msra.mxu0 0
    %85 = vmatprep.subr.bf16.mxu0 0
    %86 = vmatpush1.bf16.msra.mxu0 0
    %87 = vmatprep.subr.bf16.mxu0 0
    %88 = vmatpush1.bf16.msra.mxu0 0
    %89 = vmatprep.subr.bf16.mxu0 0
    %90 = vmatpush1.bf16.msra.mxu0 0
    %91 = vmatprep.mubr.bf16.mxu0 0
    %92 = vmatmul.mubr.bf16.gmra.mrb[0].mxu0 %v50
    %v93 = vpop.f32.mrb[0].mxu0
    %v94 = vadd.f32 %v36, %v93
    %v95 = vpop.f32.mrb[0].mxu0
    %v96 = vpop.f32.mrb[0].mxu0
    %v97 = vadd.f32 %v41, %v96
    %v98 = vpop.f32.mrb[0].mxu0
    %99 = vdwg.mxu0
    %v100 = vmax.f32 %v94, 0.0
    %v101 = vmax.f32 %v97, 0.0
    %v102 = vpack.c.bf16 %v101, %v100
    %v103 = vld [vmem:[%s3] sm:$0x7]
    %v104 = vld [vmem:[%s4] sm:$0x1f]
    %106 = vset.pattern.permute.xlu0 0
    %107 = vperm.xlu0 %106, %v104
    %v108 = vpop.permute.xlu0 %107
    %vm110 = vcmask 80896
    %v112 = vsel %vm110, %v103, 0
    %vm114 = vcmask 1044480
    %v116 = vsel %vm114, %v102, 0
    %118 = vmatprep.subr.bf16.mxu0 0
    %119 = vmatpush1.bf16.msra.mxu0 %v116
    %120 = vmatprep.subr.bf16.mxu0 0
    %121 = vmatpush1.bf16.msra.mxu0 0
    %122 = vmatprep.subr.bf16.mxu0 0
    %123 = vmatpush1.bf16.msra.mxu0 0
    %124 = vmatprep.subr.bf16.mxu0 0
    %125 = vmatpush1.bf16.msra.mxu0 0
    %126 = vmatprep.subr.bf16.mxu0 0
    %127 = vmatpush1.bf16.msra.mxu0 0
    %128 = vmatprep.subr.bf16.mxu0 0
    %129 = vmatpush1.bf16.msra.mxu0 0
    %130 = vmatprep.subr.bf16.mxu0 0
    %131 = vmatpush1.bf16.msra.mxu0 0
    %132 = vmatprep.subr.bf16.mxu0 0
    %133 = vmatpush1.bf16.msra.mxu0 0
    %134 = vmatprep.subr.bf16.mxu0 0
    %135 = vmatpush1.bf16.msra.mxu0 0
    %136 = vmatprep.subr.bf16.mxu0 0
    %137 = vmatpush1.bf16.msra.mxu0 0
    %138 = vmatprep.subr.bf16.mxu0 0
    %139 = vmatpush1.bf16.msra.mxu0 0
    %140 = vmatprep.subr.bf16.mxu0 0
    %141 = vmatpush1.bf16.msra.mxu0 0
    %142 = vmatprep.subr.bf16.mxu0 0
    %143 = vmatpush1.bf16.msra.mxu0 0
    %144 = vmatprep.subr.bf16.mxu0 0
    %145 = vmatpush1.bf16.msra.mxu0 0
    %146 = vmatprep.subr.bf16.mxu0 0
    %147 = vmatpush1.bf16.msra.mxu0 0
    %148 = vmatprep.subr.bf16.mxu0 0
    %149 = vmatpush1.bf16.msra.mxu0 0
    %150 = vmatprep.mubr.bf16.mxu0 0
    %151 = vmatmul.mubr.bf16.gmra.mrb[0].mxu0 %v112
    %v152 = vpop.f32.mrb[0].mxu0
    %v153 = vadd.f32 %v108, %v152
    %v154 = vpop.f32.mrb[0].mxu0
    %v155 = vpop.f32.mrb[0].mxu0
    %v156 = vpop.f32.mrb[0].mxu0
    %157 = vdwg.mxu0
    %v158 = vmax.f32 %v153, 0.0
    %v159 = vpack.c.bf16 %v158, %v158
    %v160 = vld [vmem:[%s5] sm:$0x1]
    %v161 = vld [vmem:[%s6] sm:$0x3]
    %163 = vset.pattern.permute.xlu0 0
    %164 = vperm.xlu0 %163, %v161
    %v165 = vpop.permute.xlu0 %164
    %v168 = vsel %vm48, %v160, 0
    %v171 = vand.u32 %v159, %v55
    %173 = vmatprep.subr.bf16.mxu0 0
    %174 = vmatpush1.bf16.msra.mxu0 %v171
    %175 = vmatprep.subr.bf16.mxu0 0
    %176 = vmatpush1.bf16.msra.mxu0 0
    %177 = vmatprep.subr.bf16.mxu0 0
    %178 = vmatpush1.bf16.msra.mxu0 0
    %179 = vmatprep.subr.bf16.mxu0 0
    %180 = vmatpush1.bf16.msra.mxu0 0
    %181 = vmatprep.subr.bf16.mxu0 0
    %182 = vmatpush1.bf16.msra.mxu0 0
    %183 = vmatprep.subr.bf16.mxu0 0
    %184 = vmatpush1.bf16.msra.mxu0 0
    %185 = vmatprep.subr.bf16.mxu0 0
    %186 = vmatpush1.bf16.msra.mxu0 0
    %187 = vmatprep.subr.bf16.mxu0 0
    %188 = vmatpush1.bf16.msra.mxu0 0
    %189 = vmatprep.subr.bf16.mxu0 0
    %190 = vmatpush1.bf16.msra.mxu0 0
    %191 = vmatprep.subr.bf16.mxu0 0
    %192 = vmatpush1.bf16.msra.mxu0 0
    %193 = vmatprep.subr.bf16.mxu0 0
    %194 = vmatpush1.bf16.msra.mxu0 0
    %195 = vmatprep.subr.bf16.mxu0 0
    %196 = vmatpush1.bf16.msra.mxu0 0
    %197 = vmatprep.subr.bf16.mxu0 0
    %198 = vmatpush1.bf16.msra.mxu0 0
    %199 = vmatprep.subr.bf16.mxu0 0
    %200 = vmatpush1.bf16.msra.mxu0 0
    %201 = vmatprep.subr.bf16.mxu0 0
    %202 = vmatpush1.bf16.msra.mxu0 0
    %203 = vmatprep.subr.bf16.mxu0 0
    %204 = vmatpush1.bf16.msra.mxu0 0
    %205 = vmatprep.mubr.bf16.mxu0 0
    %206 = vmatmul.mubr.bf16.gmra.mrb[0].mxu0 %v168
    %v207 = vpop.f32.mrb[0].mxu0
    %v208 = vadd.f32 %v165, %v207
    %v209 = vpop.f32.mrb[0].mxu0
    %v210 = vpop.f32.mrb[0].mxu0
    %v211 = vpop.f32.mrb[0].mxu0
    %212 = vdwg.mxu0
    %213 = vst [vmem:[#allocation2] sm:$0x3] %v208
    // Predicated region
    $region30: #{tpu_custom_call.1} parent=1 // pred_check
      _
    $region31: #{tpu_custom_call.1} parent=1 // pred_check_branch
      %215 = sbr.rel (0) target = $region33
    $region32: #{tpu_custom_call.1} parent=1 // pred_region
      %s217 = ssub.s32 32, 32
      %218 = vsyncadd [#allocation3], %s217
      %s220 = sshll.u32 [#allocation2], 4
      %s221 = int_to_ptr.vmem [resolvable:$true] %s220
      %223 = dma.vmem_to_hbm [thread:$0]  %s221, 32, %s7, [#allocation3]
    $region33: #{tpu_custom_call.1} parent=1 // pred_fallthru
      _
    // Predicated region
    $region34: #{tpu_custom_call.1} parent=1 // pred_check
      _
    $region35: #{tpu_custom_call.1} parent=1 // pred_check_branch
      %225 = sbr.rel (0) target = $region37
    $region36: #{tpu_custom_call.1} parent=1 // pred_region
      %226 = dma.done [#allocation3], 32
    $region37: #{tpu_custom_call.1} parent=1 // pred_fallthru
      _
    %227 = vsyncpa [#allocation3], 1

</llo_original>
